<compile_context>
chip_gen: v7x
topology: tpu7x:2x2x1
jax: 0.10.0
libtpu: 0.0.40
codegen_flags: <defaults>
</compile_context>

<pallas_src>
import functools

import jax
import jax.numpy as jnp
from jax.experimental import pallas as pl
from jax.experimental.pallas import tpu as pltpu


LANE = 128  # lane width: keep padded feature dims multiples of this
# TODO(synk): if hidden/output widths grow in real use, pad to 256 on v6e/v7x
# (2x256^2 MXU) via pltpu.get_tpu_info(); irrelevant for the 32-wide toy sizes.


def _round_up(x, m):
    return ((x + m - 1) // m) * m


def _discriminator_kernel(x_ref, w1_ref, b1_ref, w2_ref, b2_ref, w3_ref, b3_ref, o_ref):
    # Layer 1 in f32 (x arrives f32, K = input_size is tiny) + bias + ReLU.
    h1 = jnp.dot(x_ref[...], w1_ref[...], preferred_element_type=jnp.float32)
    h1 = jnp.maximum(h1 + b1_ref[...], 0.0).astype(w2_ref.dtype)

    # Layer 2: bf16 MXU operands, f32 accumulation, bias + ReLU in f32.
    h2 = jnp.dot(h1, w2_ref[...], preferred_element_type=jnp.float32)
    h2 = jnp.maximum(h2 + b2_ref[...], 0.0).astype(w3_ref.dtype)

    # Layer 3 + sigmoid (EUP exp); lane-dense bf16 store.
    logits = jnp.dot(h2, w3_ref[...], preferred_element_type=jnp.float32) + b3_ref[...]
    o_ref[...] = jax.nn.sigmoid(logits).astype(o_ref.dtype)


def prepare_params(params, *, compute_dtype=jnp.bfloat16):
    """One-time pad/cast of weights & biases (hoisted out of the per-call path).

    * Hidden/output feature dims zero-padded to multiples of 128 so every
      matmul operand and the output store are lane-dense.
    * Layer-1 weight stays f32 (matches f32 x; K=input_size matmul is cheap);
      layer-2/3 weights cast to `compute_dtype` for the MXU.
    * Biases stay f32 (added post-accumulation).
    Zero padding is exact: padded hidden units stay 0 through ReLU, padded
    output columns are sliced off by the wrapper.
    """
    w1, b1 = params["w1"], params["b1"]
    w2, b2 = params["w2"], params["b2"]
    w3, b3 = params["w3"], params["b3"]
    input_size, hidden_size = w1.shape
    output_size = w3.shape[1]

    hid_p = _round_up(hidden_size, LANE)
    out_p = _round_up(output_size, LANE)

    def pad2(a, rows, cols, dtype):
        out = jnp.zeros((rows, cols), dtype)
        return out.at[: a.shape[0], : a.shape[1]].set(a.astype(dtype))

    return {
        "w1": pad2(w1, input_size, hid_p, jnp.float32),
        "b1": pad2(b1, 1, hid_p, jnp.float32),
        "w2": pad2(w2, hid_p, hid_p, compute_dtype),
        "b2": pad2(b2, 1, hid_p, jnp.float32),
        "w3": pad2(w3, hid_p, out_p, compute_dtype),
        "b3": pad2(b3, 1, out_p, jnp.float32),
    }


@functools.partial(jax.jit, static_argnames=("output_size",))
def discriminator_forward(x, prepared, *, output_size):
    """Fused 3-layer MLP discriminator forward on pre-padded params.

    x: (batch, input_size) float32
    prepared: output of prepare_params(...)
    output_size: logical (unpadded) number of output features.
    """
    w1, b1 = prepared["w1"], prepared["b1"]
    w2, b2 = prepared["w2"], prepared["b2"]
    w3, b3 = prepared["w3"], prepared["b3"]

    batch, input_size = x.shape
    hid_p = w1.shape[1]
    out_p = w3.shape[1]

    # Batch tile: multiple of 128 when possible; >=2 grid steps for batch>=256
    # (keeps both v7x TensorCores busy with dimension_semantics="parallel"),
    # bigger tiles for very large batches (fewer 0.35us grid-step overheads on
    # single-TC v5e/v6e). VMEM per step stays well under 2 MiB.
    if batch >= 2048:
        tb = 512
    elif batch >= 128:
        tb = 128
    else:
        tb = _round_up(batch, 8)
    batch_p = _round_up(batch, tb)

    if batch_p != batch:
        x = jnp.pad(x, ((0, batch_p - batch), (0, 0)))

    grid = (batch_p // tb,)

    # Weights/biases are VMEM-resident across the batch grid (same block every step).
    resident = lambda shape: pl.BlockSpec(shape, lambda i: (0, 0))

    flops = 2 * batch_p * (input_size * hid_p + hid_p * hid_p + hid_p * out_p)
    bytes_accessed = (
        batch_p * input_size * 4                      # x (f32, unpadded features)
        + w1.size * w1.dtype.itemsize + b1.size * b1.dtype.itemsize
        + w2.size * w2.dtype.itemsize + b2.size * b2.dtype.itemsize
        + w3.size * w3.dtype.itemsize + b3.size * b3.dtype.itemsize
        + batch_p * out_p * 2                         # bf16 output
    )

    out_padded = pl.pallas_call(
        _discriminator_kernel,
        out_shape=jax.ShapeDtypeStruct((batch_p, out_p), jnp.bfloat16),
        grid=grid,
        in_specs=[
            # x streamed in batch tiles, features unpadded (full last dim).
            pl.BlockSpec((tb, input_size), lambda i: (i, 0)),
            resident(w1.shape), resident(b1.shape),
            resident(w2.shape), resident(b2.shape),
            resident(w3.shape), resident(b3.shape),
        ],
        out_specs=pl.BlockSpec((tb, out_p), lambda i: (i, 0)),
        compiler_params=pltpu.CompilerParams(
            dimension_semantics=("parallel",),        # shard batch tiles across TCs (v7x)
        ),
        cost_estimate=pl.CostEstimate(
            flops=flops,
            transcendentals=batch_p * out_p,
            bytes_accessed=bytes_accessed,
        ),
    )(x, w1, b1, w2, b2, w3, b3)

    # Slice off padded batch rows / output columns; return f32 like the module.
    return out_padded[:batch, :output_size].astype(jnp.float32)


def init_discriminator_params(key, input_size, hidden_size, output_size):
    """Deterministic init mirroring torch.nn.Linear default
    (uniform in [-1/sqrt(fan_in), 1/sqrt(fan_in)]). Weights stored as
    (in_features, out_features), i.e. pre-transposed vs. PyTorch."""
    ks = jax.random.split(key, 6)

    def linear(kw, kb, fan_in, fan_out):
        bound = 1.0 / jnp.sqrt(fan_in)
        w = jax.random.uniform(kw, (fan_in, fan_out), jnp.float32, -bound, bound)
        b = jax.random.uniform(kb, (1, fan_out), jnp.float32, -bound, bound)
        return w, b

    w1, b1 = linear(ks[0], ks[1], input_size, hidden_size)
    w2, b2 = linear(ks[2], ks[3], hidden_size, hidden_size)
    w3, b3 = linear(ks[4], ks[5], hidden_size, output_size)
    return {"w1": w1, "b1": b1, "w2": w2, "b2": b2, "w3": w3, "b3": b3}


def _reference_forward(x, p):
    h1 = jnp.maximum(x @ p["w1"] + p["b1"], 0.0)
    h2 = jnp.maximum(h1 @ p["w2"] + p["b2"], 0.0)
    return jax.nn.sigmoid(h2 @ p["w3"] + p["b3"])


if __name__ == "__main__":
    key = jax.random.PRNGKey(0)
    k_x, k_p = jax.random.split(key)

    # Discriminator-shaped problem: many samples, small features, scalar decision.
    batch, input_size, hidden_size, output_size = 512, 16, 32, 1
    x = jax.random.normal(k_x, (batch, input_size), dtype=jnp.float32)
    params = init_discriminator_params(k_p, input_size, hidden_size, output_size)

    # One-time padding/cast of the weights (hoisted out of the forward path).
    prepared = prepare_params(params)
    prepared = jax.tree_util.tree_map(jax.block_until_ready, prepared)

    out = discriminator_forward(x, prepared, output_size=output_size)
    out = jax.block_until_ready(out)

    ref = _reference_forward(x, params)
    assert out.shape == (batch, output_size), out.shape
    # Layers 2/3 use bf16 MXU operands (f32 accumulate) and the store is bf16,
    # so tolerance is loosened vs the pure-f32 reference.
    max_err = float(jnp.max(jnp.abs(out - ref)))
    assert max_err < 2e-2, max_err

    print("KERNEL_OK")
</pallas_src>

<mosaic_0001>
module attributes {stable_mosaic.version = 11 : i64} {
  func.func @_discriminator_kernel(%arg0: i32, %arg1: memref<128x16xf32, #tpu.memory_space<vmem>>, %arg2: memref<16x128xf32, #tpu.memory_space<vmem>>, %arg3: memref<1x128xf32, #tpu.memory_space<vmem>>, %arg4: memref<128x128xbf16, #tpu.memory_space<vmem>>, %arg5: memref<1x128xf32, #tpu.memory_space<vmem>>, %arg6: memref<128x128xbf16, #tpu.memory_space<vmem>>, %arg7: memref<1x128xf32, #tpu.memory_space<vmem>>, %arg8: memref<128x128xbf16, #tpu.memory_space<vmem>>) attributes {dimension_semantics = [#tpu.dimension_semantics<parallel>], iteration_bounds = array<i64: 4>, scalar_prefetch = 0 : i64, scratch_operands = 0 : i64, tpu.core_type = #tpu.core_type<tc>, window_params = [{transform_indices = @transform_0, window_bounds = array<i64: 128, 16>}, {pipeline_mode = #tpu.pipeline_mode<synchronous>, transform_indices = @transform_1, window_bounds = array<i64: 16, 128>}, {pipeline_mode = #tpu.pipeline_mode<synchronous>, transform_indices = @transform_2, window_bounds = array<i64: 1, 128>}, {pipeline_mode = #tpu.pipeline_mode<synchronous>, transform_indices = @transform_3, window_bounds = array<i64: 128, 128>}, {pipeline_mode = #tpu.pipeline_mode<synchronous>, transform_indices = @transform_4, window_bounds = array<i64: 1, 128>}, {pipeline_mode = #tpu.pipeline_mode<synchronous>, transform_indices = @transform_5, window_bounds = array<i64: 128, 128>}, {pipeline_mode = #tpu.pipeline_mode<synchronous>, transform_indices = @transform_6, window_bounds = array<i64: 1, 128>}, {transform_indices = @transform_7, window_bounds = array<i64: 128, 128>}]} {
    %c0 = arith.constant 0 : index
    %c0_0 = arith.constant 0 : index
    %0 = vector.load %arg1[%c0, %c0_0] : memref<128x16xf32, #tpu.memory_space<vmem>>, vector<128x16xf32>
    %c0_1 = arith.constant 0 : index
    %c0_2 = arith.constant 0 : index
    %1 = vector.load %arg2[%c0_1, %c0_2] : memref<16x128xf32, #tpu.memory_space<vmem>>, vector<16x128xf32>
    %cst = arith.constant dense<0.000000e+00> : vector<128x128xf32>
    %2 = tpu.matmul %0, %1, %cst {dimension_numbers = #tpu.dot_dimension_numbers<[1], [0], [0], [1], [0, 0, 1, 1], [], []>} : vector<128x16xf32>, vector<16x128xf32>, vector<128x128xf32> -> vector<128x128xf32>
    %c0_3 = arith.constant 0 : index
    %c0_4 = arith.constant 0 : index
    %3 = vector.load %arg3[%c0_3, %c0_4] : memref<1x128xf32, #tpu.memory_space<vmem>>, vector<1x128xf32>
    %4 = vector.broadcast %3 : vector<1x128xf32> to vector<128x128xf32>
    %5 = arith.addf %2, %4 : vector<128x128xf32>
    %cst_5 = arith.constant 0.000000e+00 : f32
    %6 = vector.broadcast %cst_5 : f32 to vector<128x128xf32>
    %7 = arith.maximumf %5, %6 : vector<128x128xf32>
    %8 = arith.truncf %7 : vector<128x128xf32> to vector<128x128xbf16>
    %c0_6 = arith.constant 0 : index
    %c0_7 = arith.constant 0 : index
    %9 = vector.load %arg4[%c0_6, %c0_7] : memref<128x128xbf16, #tpu.memory_space<vmem>>, vector<128x128xbf16>
    %cst_8 = arith.constant dense<0.000000e+00> : vector<128x128xf32>
    %10 = tpu.matmul %8, %9, %cst_8 {dimension_numbers = #tpu.dot_dimension_numbers<[1], [0], [0], [1], [0, 0, 1, 1], [], []>} : vector<128x128xbf16>, vector<128x128xbf16>, vector<128x128xf32> -> vector<128x128xf32>
    %c0_9 = arith.constant 0 : index
    %c0_10 = arith.constant 0 : index
    %11 = vector.load %arg5[%c0_9, %c0_10] : memref<1x128xf32, #tpu.memory_space<vmem>>, vector<1x128xf32>
    %12 = vector.broadcast %11 : vector<1x128xf32> to vector<128x128xf32>
    %13 = arith.addf %10, %12 : vector<128x128xf32>
    %cst_11 = arith.constant 0.000000e+00 : f32
    %14 = vector.broadcast %cst_11 : f32 to vector<128x128xf32>
    %15 = arith.maximumf %13, %14 : vector<128x128xf32>
    %16 = arith.truncf %15 : vector<128x128xf32> to vector<128x128xbf16>
    %c0_12 = arith.constant 0 : index
    %c0_13 = arith.constant 0 : index
    %17 = vector.load %arg6[%c0_12, %c0_13] : memref<128x128xbf16, #tpu.memory_space<vmem>>, vector<128x128xbf16>
    %cst_14 = arith.constant dense<0.000000e+00> : vector<128x128xf32>
    %18 = tpu.matmul %16, %17, %cst_14 {dimension_numbers = #tpu.dot_dimension_numbers<[1], [0], [0], [1], [0, 0, 1, 1], [], []>} : vector<128x128xbf16>, vector<128x128xbf16>, vector<128x128xf32> -> vector<128x128xf32>
    %c0_15 = arith.constant 0 : index
    %c0_16 = arith.constant 0 : index
    %19 = vector.load %arg7[%c0_15, %c0_16] : memref<1x128xf32, #tpu.memory_space<vmem>>, vector<1x128xf32>
    %20 = vector.broadcast %19 : vector<1x128xf32> to vector<128x128xf32>
    %21 = arith.addf %18, %20 : vector<128x128xf32>
    %22 = arith.negf %21 : vector<128x128xf32>
    %23 = math.exp %22 : vector<128x128xf32>
    %cst_17 = arith.constant 1.000000e+00 : f32
    %24 = vector.broadcast %cst_17 : f32 to vector<128x128xf32>
    %25 = arith.addf %24, %23 : vector<128x128xf32>
    %26 = arith.divf %24, %25 : vector<128x128xf32>
    %27 = arith.truncf %26 : vector<128x128xf32> to vector<128x128xbf16>
    %c0_18 = arith.constant 0 : index
    %c0_19 = arith.constant 0 : index
    %28 = vector.load %arg8[%c0_18, %c0_19] : memref<128x128xbf16, #tpu.memory_space<vmem>>, vector<128x128xbf16>
    tpu.vector_store %arg8[%c0_18, %c0_19], %27 {strides = array<i32>} : memref<128x128xbf16, #tpu.memory_space<vmem>>, vector<128x128xbf16>,
    return
  }
  func.func @transform_0(%arg0: i32) -> (i32, i32) {
    %c0_i32 = arith.constant 0 : i32
    %c0_i32_0 = arith.constant 0 : i32
    return %arg0, %c0_i32 : i32, i32
  }
  func.func @transform_1(%arg0: i32) -> (i32, i32) {
    %c0_i32 = arith.constant 0 : i32
    %c0_i32_0 = arith.constant 0 : i32
    %c0_i32_1 = arith.constant 0 : i32
    return %c0_i32, %c0_i32_0 : i32, i32
  }
  func.func @transform_2(%arg0: i32) -> (i32, i32) {
    %c0_i32 = arith.constant 0 : i32
    %c0_i32_0 = arith.constant 0 : i32
    %c0_i32_1 = arith.constant 0 : i32
    return %c0_i32, %c0_i32_0 : i32, i32
  }
  func.func @transform_3(%arg0: i32) -> (i32, i32) {
    %c0_i32 = arith.constant 0 : i32
    %c0_i32_0 = arith.constant 0 : i32
    %c0_i32_1 = arith.constant 0 : i32
    return %c0_i32, %c0_i32_0 : i32, i32
  }
  func.func @transform_4(%arg0: i32) -> (i32, i32) {
    %c0_i32 = arith.constant 0 : i32
    %c0_i32_0 = arith.constant 0 : i32
    %c0_i32_1 = arith.constant 0 : i32
    return %c0_i32, %c0_i32_0 : i32, i32
  }
  func.func @transform_5(%arg0: i32) -> (i32, i32) {
    %c0_i32 = arith.constant 0 : i32
    %c0_i32_0 = arith.constant 0 : i32
    %c0_i32_1 = arith.constant 0 : i32
    return %c0_i32, %c0_i32_0 : i32, i32
  }
  func.func @transform_6(%arg0: i32) -> (i32, i32) {
    %c0_i32 = arith.constant 0 : i32
    %c0_i32_0 = arith.constant 0 : i32
    %c0_i32_1 = arith.constant 0 : i32
    return %c0_i32, %c0_i32_0 : i32, i32
  }
  func.func @transform_7(%arg0: i32) -> (i32, i32) {
    %c0_i32 = arith.constant 0 : i32
    %c0_i32_0 = arith.constant 0 : i32
    return %arg0, %c0_i32 : i32, i32
  }
}

</mosaic_0001>

<llo_original>
// kernel: discriminator_forward.1
$region0: #{discriminator_forward.1}
  #allocation0 [shape = 'u32[]', space=smem, size = 0x4, offset = 0x4, fixed_abs, tag = 'smem constant byte address 0x4 - core index']
  #allocation1 [shape = 'u32[144,128]{1,0:T(1,128)}', space=vmem, size = 0x12000, scoped, tag = 'internal scratch']
  %s0 = inlined_call_operand.vmem [shape: f32[512,16], index: 0, kind: input, shape index: {}]
  %s1 = inlined_call_operand.vmem [shape: f32[16,128], index: 1, kind: input, shape index: {}]
  %s2 = inlined_call_operand.vmem [shape: f32[1,128], index: 2, kind: input, shape index: {}]
  %s3 = inlined_call_operand.vmem [shape: bf16[128,128], index: 3, kind: input, shape index: {}]
  %s4 = inlined_call_operand.vmem [shape: f32[1,128], index: 4, kind: input, shape index: {}]
  %s5 = inlined_call_operand.vmem [shape: bf16[128,128], index: 5, kind: input, shape index: {}]
  %s6 = inlined_call_operand.vmem [shape: f32[1,128], index: 6, kind: input, shape index: {}]
  %s7 = inlined_call_operand.vmem [shape: bf16[512,128], index: 7, kind: output, shape index: {}]
  %s8 = sld [smem:[#allocation0]]
  $region61: #{discriminator_forward.1} parent=0
    _
  %s10 = ssub.s32 1, %s8
  %s11 = scalar_select 0, %s10, %s8
  loop: start=0, step=1, limit=6
  $region2: #{discriminator_forward.1} parent=0 // loop_pre_header
    _
  $region3: #{discriminator_forward.1} parent=0 // loop_header
    %s13 = sphi 0, %s17
    %p14 = scmp.ge.s32.totalorder %s13, 6
    %s23 = sphi 0, %s25
    %s26 = sphi 0, %s23
    %s27 = sphi 0, %s26
    %s43 = sphi 0, %s27
    %s47 = sphi 0, %s47
    %s49 = sphi 0, %s47
    %s50 = sphi 0, %s49
    %s64 = sphi 0, %s50
    %s68 = sphi 0, %s68
    %s70 = sphi 0, %s68
    %s71 = sphi 0, %s70
    %s85 = sphi 0, %s71
    %s89 = sphi 0, %s89
    %s91 = sphi 0, %s89
    %s92 = sphi 0, %s91
    %s106 = sphi 0, %s92
    %s110 = sphi 0, %s110
    %s112 = sphi 0, %s110
    %s113 = sphi 0, %s112
    %s127 = sphi 0, %s113
    %s131 = sphi 0, %s131
    %s133 = sphi 0, %s131
    %s134 = sphi 0, %s133
    %s148 = sphi 0, %s134
    %s152 = sphi 0, %s152
    %s154 = sphi 0, %s152
    %s155 = sphi 0, %s154
    %s169 = sphi 0, %s155
    %s175 = sphi 0, %s177
    %s178 = sphi 0, %s175
    %s179 = sphi 0, %s178
    %s195 = sphi 0, %s179
  $region4: #{discriminator_forward.1} parent=0 // loop_header_branch
    %16 = sbr.rel (%p14) target = $region8
  $region5: #{discriminator_forward.1} parent=0 // loop_body
    %s18 = ssub.s32 %s13, 1
    %s19 = ssub.s32 %s13, 2
    %s20 = sadd.s32 %s13, 1
    %s21 = ssub.s32 %s13, %s20
    %p22 = scmp.eq.s32.totalorder %s21, 0
    %s24 = sadd.s32 %s23, 1
    %s25 = scalar_select %p22, %s23, %s24
    %p28 = pneg %p22
    %p29 = scmp.eq.s32.totalorder %s13, 3
    %p30 = por %p28, %p29
    %p31 = scmp.ne.s32.totalorder %s23, %s26
    %p32 = scmp.eq.s32.totalorder %s13, 0
    %p33 = por %p31, %p32
    %p34 = scmp.ne.s32.totalorder %s23, %s26
    %p35 = scmp.eq.s32.totalorder %s18, 3
    %p36 = por %p34, %p35
    %p37 = scmp.ne.s32.totalorder %s26, %s27
    %p38 = scmp.eq.s32.totalorder %s18, 0
    %p39 = por %p37, %p38
    %p40 = scmp.ne.s32.totalorder %s26, %s27
    %p41 = scmp.eq.s32.totalorder %s19, 3
    %p42 = por %p40, %p41
    %p44 = scmp.ne.s32.totalorder %s27, %s43
    %p45 = scmp.eq.s32.totalorder %s19, 0
    %p46 = por %p44, %p45
    %s48 = sadd.s32 %s47, 1
    %p51 = scmp.eq.s32.totalorder %s13, 3
    %p52 = scmp.ne.s32.totalorder %s47, %s49
    %p53 = scmp.eq.s32.totalorder %s13, 0
    %p54 = por %p52, %p53
    %p55 = scmp.ne.s32.totalorder %s47, %s49
    %p56 = scmp.eq.s32.totalorder %s18, 3
    %p57 = por %p55, %p56
    %p58 = scmp.ne.s32.totalorder %s49, %s50
    %p59 = scmp.eq.s32.totalorder %s18, 0
    %p60 = por %p58, %p59
    %p61 = scmp.ne.s32.totalorder %s49, %s50
    %p62 = scmp.eq.s32.totalorder %s19, 3
    %p63 = por %p61, %p62
    %p65 = scmp.ne.s32.totalorder %s50, %s64
    %p66 = scmp.eq.s32.totalorder %s19, 0
    %p67 = por %p65, %p66
    %s69 = sadd.s32 %s68, 1
    %p72 = scmp.eq.s32.totalorder %s13, 3
    %p73 = scmp.ne.s32.totalorder %s68, %s70
    %p74 = scmp.eq.s32.totalorder %s13, 0
    %p75 = por %p73, %p74
    %p76 = scmp.ne.s32.totalorder %s68, %s70
    %p77 = scmp.eq.s32.totalorder %s18, 3
    %p78 = por %p76, %p77
    %p79 = scmp.ne.s32.totalorder %s70, %s71
    %p80 = scmp.eq.s32.totalorder %s18, 0
    %p81 = por %p79, %p80
    %p82 = scmp.ne.s32.totalorder %s70, %s71
    %p83 = scmp.eq.s32.totalorder %s19, 3
    %p84 = por %p82, %p83
    %p86 = scmp.ne.s32.totalorder %s71, %s85
    %p87 = scmp.eq.s32.totalorder %s19, 0
    %p88 = por %p86, %p87
    %s90 = sadd.s32 %s89, 1
    %p93 = scmp.eq.s32.totalorder %s13, 3
    %p94 = scmp.ne.s32.totalorder %s89, %s91
    %p95 = scmp.eq.s32.totalorder %s13, 0
    %p96 = por %p94, %p95
    %p97 = scmp.ne.s32.totalorder %s89, %s91
    %p98 = scmp.eq.s32.totalorder %s18, 3
    %p99 = por %p97, %p98
    %p100 = scmp.ne.s32.totalorder %s91, %s92
    %p101 = scmp.eq.s32.totalorder %s18, 0
    %p102 = por %p100, %p101
    %p103 = scmp.ne.s32.totalorder %s91, %s92
    %p104 = scmp.eq.s32.totalorder %s19, 3
    %p105 = por %p103, %p104
    %p107 = scmp.ne.s32.totalorder %s92, %s106
    %p108 = scmp.eq.s32.totalorder %s19, 0
    %p109 = por %p107, %p108
    %s111 = sadd.s32 %s110, 1
    %p114 = scmp.eq.s32.totalorder %s13, 3
    %p115 = scmp.ne.s32.totalorder %s110, %s112
    %p116 = scmp.eq.s32.totalorder %s13, 0
    %p117 = por %p115, %p116
    %p118 = scmp.ne.s32.totalorder %s110, %s112
    %p119 = scmp.eq.s32.totalorder %s18, 3
    %p120 = por %p118, %p119
    %p121 = scmp.ne.s32.totalorder %s112, %s113
    %p122 = scmp.eq.s32.totalorder %s18, 0
    %p123 = por %p121, %p122
    %p124 = scmp.ne.s32.totalorder %s112, %s113
    %p125 = scmp.eq.s32.totalorder %s19, 3
    %p126 = por %p124, %p125
    %p128 = scmp.ne.s32.totalorder %s113, %s127
    %p129 = scmp.eq.s32.totalorder %s19, 0
    %p130 = por %p128, %p129
    %s132 = sadd.s32 %s131, 1
    %p135 = scmp.eq.s32.totalorder %s13, 3
    %p136 = scmp.ne.s32.totalorder %s131, %s133
    %p137 = scmp.eq.s32.totalorder %s13, 0
    %p138 = por %p136, %p137
    %p139 = scmp.ne.s32.totalorder %s131, %s133
    %p140 = scmp.eq.s32.totalorder %s18, 3
    %p141 = por %p139, %p140
    %p142 = scmp.ne.s32.totalorder %s133, %s134
    %p143 = scmp.eq.s32.totalorder %s18, 0
    %p144 = por %p142, %p143
    %p145 = scmp.ne.s32.totalorder %s133, %s134
    %p146 = scmp.eq.s32.totalorder %s19, 3
    %p147 = por %p145, %p146
    %p149 = scmp.ne.s32.totalorder %s134, %s148
    %p150 = scmp.eq.s32.totalorder %s19, 0
    %p151 = por %p149, %p150
    %s153 = sadd.s32 %s152, 1
    %p156 = scmp.eq.s32.totalorder %s13, 3
    %p157 = scmp.ne.s32.totalorder %s152, %s154
    %p158 = scmp.eq.s32.totalorder %s13, 0
    %p159 = por %p157, %p158
    %p160 = scmp.ne.s32.totalorder %s152, %s154
    %p161 = scmp.eq.s32.totalorder %s18, 3
    %p162 = por %p160, %p161
    %p163 = scmp.ne.s32.totalorder %s154, %s155
    %p164 = scmp.eq.s32.totalorder %s18, 0
    %p165 = por %p163, %p164
    %p166 = scmp.ne.s32.totalorder %s154, %s155
    %p167 = scmp.eq.s32.totalorder %s19, 3
    %p168 = por %p166, %p167
    %p170 = scmp.ne.s32.totalorder %s155, %s169
    %p171 = scmp.eq.s32.totalorder %s19, 0
    %p172 = por %p170, %p171
    %s173 = ssub.s32 %s13, %s20
    %p174 = scmp.eq.s32.totalorder %s173, 0
    %s176 = sadd.s32 %s175, 1
    %s177 = scalar_select %p174, %s175, %s176
    %p180 = pneg %p174
    %p181 = scmp.eq.s32.totalorder %s13, 3
    %p182 = por %p180, %p181
    %p183 = scmp.ne.s32.totalorder %s175, %s178
    %p184 = scmp.eq.s32.totalorder %s13, 0
    %p185 = por %p183, %p184
    %p186 = scmp.ne.s32.totalorder %s175, %s178
    %p187 = scmp.eq.s32.totalorder %s18, 3
    %p188 = por %p186, %p187
    %p189 = scmp.ne.s32.totalorder %s178, %s179
    %p190 = scmp.eq.s32.totalorder %s18, 0
    %p191 = por %p189, %p190
    %p192 = scmp.ne.s32.totalorder %s178, %s179
    %p193 = scmp.eq.s32.totalorder %s19, 3
    %p194 = por %p192, %p193
    %p196 = scmp.ne.s32.totalorder %s179, %s195
    %p197 = scmp.eq.s32.totalorder %s19, 0
    %p198 = por %p196, %p197
    %p199 = scmp.le.s32.totalorder 1, %s13
    %p200 = scmp.lt.s32.totalorder %s13, 5
    %p201 = pnand %p199, %p200
    %p202 = pneg %p201
    // Predicated region
    $region9: #{discriminator_forward.1} parent=5 // pred_check
      _
    $region10: #{discriminator_forward.1} parent=5 // pred_check_branch
      %204 = sbr.rel (%p201) target = $region12
    $region11: #{discriminator_forward.1} parent=5 // pred_region
      %s205 = ssub.s32 %s13, 1
      // Predicated region
      $region13: #{discriminator_forward.1} parent=11 // pred_check
        %p206 = pneg %p60
      $region14: #{discriminator_forward.1} parent=11 // pred_check_branch
        %208 = sbr.rel (%p206) target = $region16
      $region15: #{discriminator_forward.1} parent=11 // pred_region
        _
      $region16: #{discriminator_forward.1} parent=11 // pred_fallthru
        _
      // Predicated region
      $region17: #{discriminator_forward.1} parent=11 // pred_check
        %p209 = pneg %p81
      $region18: #{discriminator_forward.1} parent=11 // pred_check_branch
        %211 = sbr.rel (%p209) target = $region20
      $region19: #{discriminator_forward.1} parent=11 // pred_region
        _
      $region20: #{discriminator_forward.1} parent=11 // pred_fallthru
        _
      // Predicated region
      $region21: #{discriminator_forward.1} parent=11 // pred_check
        %p212 = pneg %p102
      $region22: #{discriminator_forward.1} parent=11 // pred_check_branch
        %214 = sbr.rel (%p212) target = $region24
      $region23: #{discriminator_forward.1} parent=11 // pred_region
        _
      $region24: #{discriminator_forward.1} parent=11 // pred_fallthru
        _
      // Predicated region
      $region25: #{discriminator_forward.1} parent=11 // pred_check
        %p215 = pneg %p123
      $region26: #{discriminator_forward.1} parent=11 // pred_check_branch
        %217 = sbr.rel (%p215) target = $region28
      $region27: #{discriminator_forward.1} parent=11 // pred_region
        _
      $region28: #{discriminator_forward.1} parent=11 // pred_fallthru
        _
      // Predicated region
      $region29: #{discriminator_forward.1} parent=11 // pred_check
        %p218 = pneg %p144
      $region30: #{discriminator_forward.1} parent=11 // pred_check_branch
        %220 = sbr.rel (%p218) target = $region32
      $region31: #{discriminator_forward.1} parent=11 // pred_region
        _
      $region32: #{discriminator_forward.1} parent=11 // pred_fallthru
        _
      // Predicated region
      $region33: #{discriminator_forward.1} parent=11 // pred_check
        %p221 = pneg %p165
      $region34: #{discriminator_forward.1} parent=11 // pred_check_branch
        %223 = sbr.rel (%p221) target = $region36
      $region35: #{discriminator_forward.1} parent=11 // pred_region
        _
      $region36: #{discriminator_forward.1} parent=11 // pred_fallthru
        _
    $region12: #{discriminator_forward.1} parent=5 // pred_fallthru
      _
    %p224 = scmp.lt.s32.totalorder %s13, 4
    // Predicated region
    $region37: #{discriminator_forward.1} parent=5 // pred_check
      %p225 = pneg %p224
    $region38: #{discriminator_forward.1} parent=5 // pred_check_branch
      %227 = sbr.rel (%p225) target = $region40
    $region39: #{discriminator_forward.1} parent=5 // pred_region
      // Predicated region
      $region41: #{discriminator_forward.1} parent=39 // pred_check
        %p228 = pneg %p33
      $region42: #{discriminator_forward.1} parent=39 // pred_check_branch
        %230 = sbr.rel (%p228) target = $region44
      $region43: #{discriminator_forward.1} parent=39 // pred_region
        %s231 = smul.u32 16, %s13
        %p232 = scmp.lt.s32.totalorder %s231, 63
        %s233 = scalar_select %p232, %s231, 63
        %s234 = smul.addr %s233, 8
        %s235 = scalar_lea.vmem %s0, %s234
        %s236 = smul.u32 16, %s13
      $region44: #{discriminator_forward.1} parent=39 // pred_fallthru
        _
    $region40: #{discriminator_forward.1} parent=5 // pred_fallthru
      _
    %p237 = scmp.le.s32.totalorder 1, %s13
    %p238 = scmp.lt.s32.totalorder %s13, 5
    %p239 = pnand %p237, %p238
    %p240 = pneg %p239
    // Predicated region
    $region45: #{discriminator_forward.1} parent=5 // pred_check
      _
    $region46: #{discriminator_forward.1} parent=5 // pred_check_branch
      %242 = sbr.rel (%p239) target = $region48
    $region47: #{discriminator_forward.1} parent=5 // pred_region
      %s243 = ssub.s32 %s13, 1
      %s244 = smul.u32 16, %s18
      %p245 = scmp.lt.s32.totalorder %s244, 63
      %s246 = scalar_select %p245, %s244, 63
      %s247 = smul.addr %s246, 8
      %s248 = scalar_lea.vmem %s0, %s247
      %p249 = pneg %p39
      %p250 = pneg %p36
      %p251 = pneg %p60
      %p252 = pneg %p57
      %p253 = pneg %p81
      %p254 = pneg %p78
      %p255 = pneg %p102
      %p256 = pneg %p99
      %p257 = pneg %p123
      %p258 = pneg %p120
      %p259 = pneg %p144
      %p260 = pneg %p141
      %p261 = pneg %p165
      %p262 = pneg %p162
      %p263 = pneg %p191
      %p264 = pneg %p188
      %s265 = smul.u32 16, %s18
      %p266 = scmp.lt.s32.totalorder %s265, 63
      %s267 = scalar_select %p266, %s265, 63
      %s268 = smul.addr %s267, 4
      %s269 = scalar_lea.vmem %s7, %s268
      %s270 = smul.u32 16, %s18
      %p271 = scmp.lt.s32.totalorder %s270, 63
      %s272 = scalar_select %p271, %s270, 63
      %s273 = smul.addr %s272, 8
      %s274 = scalar_lea.vmem %s0, %s273
      %s275 = smul.u32 16, %s18
      %s276 = smul.u32 16, %s18
      %p277 = scmp.lt.s32.totalorder %s276, 63
      %s278 = scalar_select %p277, %s276, 63
      %s279 = smul.addr %s278, 4
      %s280 = scalar_lea.vmem %s7, %s279
      %s281 = smul.u32 16, %s18
      %v283 = vld [vmem:[%s274] sm:$0xff]
      %v284 = vld [vmem:[%s274 + $0x8] sm:$0xff]
      %v285 = vld [vmem:[%s274 + $0x10] sm:$0xff]
      %v286 = vld [vmem:[%s274 + $0x18] sm:$0xff]
      %v287 = vld [vmem:[%s274 + $0x20] sm:$0xff]
      %v288 = vld [vmem:[%s274 + $0x28] sm:$0xff]
      %v289 = vld [vmem:[%s274 + $0x30] sm:$0xff]
      %v290 = vld [vmem:[%s274 + $0x38] sm:$0xff]
      %v291 = vld [vmem:[%s274 + $0x40] sm:$0xff]
      %v292 = vld [vmem:[%s274 + $0x48] sm:$0xff]
      %v293 = vld [vmem:[%s274 + $0x50] sm:$0xff]
      %v294 = vld [vmem:[%s274 + $0x58] sm:$0xff]
      %v295 = vld [vmem:[%s274 + $0x60] sm:$0xff]
      %v296 = vld [vmem:[%s274 + $0x68] sm:$0xff]
      %v297 = vld [vmem:[%s274 + $0x70] sm:$0xff]
      %v298 = vld [vmem:[%s274 + $0x78] sm:$0xff]
      %v299 = vld [vmem:[%s1] sm:$0xff]
      %v300 = vld [vmem:[%s1 + $0x8] sm:$0xff]
      %v301 = vld [vmem:[%s2] sm:$0x1]
      %v303 = vlaneseq
      %v304 = vshrl.u32 %v303, 7
      %v305 = vsub.s32 0, %v304
      %v306 = vrot.slane %v301, %v305
      %vm308 = vcmask 130048
      %v310 = vsel %vm308, %v283, 0
      %v313 = vsel %vm308, %v284, 0
      %v316 = vsel %vm308, %v285, 0
      %v319 = vsel %vm308, %v286, 0
      %v322 = vsel %vm308, %v287, 0
      %v325 = vsel %vm308, %v288, 0
      %v328 = vsel %vm308, %v289, 0
      %v331 = vsel %vm308, %v290, 0
      %v334 = vsel %vm308, %v291, 0
      %v337 = vsel %vm308, %v292, 0
      %v340 = vsel %vm308, %v293, 0
      %v343 = vsel %vm308, %v294, 0
      %v346 = vsel %vm308, %v295, 0
      %v349 = vsel %vm308, %v296, 0
      %v352 = vsel %vm308, %v297, 0
      %v355 = vsel %vm308, %v298, 0
      %357 = vmatprep.subr.mxu0 0.0
      %358 = vmatpush1.msra.mxu0 %v299
      %359 = vmatprep.subr.mxu0 0.0
      %360 = vmatpush1.msra.mxu0 %v300
      %361 = vmatprep.subr.mxu0 0.0
      %362 = vmatpush1.msra.mxu0 0.0
      %363 = vmatprep.subr.mxu0 0.0
      %364 = vmatpush1.msra.mxu0 0.0
      %365 = vmatprep.subr.mxu0 0.0
      %366 = vmatpush1.msra.mxu0 0.0
      %367 = vmatprep.subr.mxu0 0.0
      %368 = vmatpush1.msra.mxu0 0.0
      %369 = vmatprep.subr.mxu0 0.0
      %370 = vmatpush1.msra.mxu0 0.0
      %371 = vmatprep.subr.mxu0 0.0
      %372 = vmatpush1.msra.mxu0 0.0
      %373 = vmatprep.subr.mxu0 0.0
      %374 = vmatpush1.msra.mxu0 0.0
      %375 = vmatprep.subr.mxu0 0.0
      %376 = vmatpush1.msra.mxu0 0.0
      %377 = vmatprep.subr.mxu0 0.0
      %378 = vmatpush1.msra.mxu0 0.0
      %379 = vmatprep.subr.mxu0 0.0
      %380 = vmatpush1.msra.mxu0 0.0
      %381 = vmatprep.subr.mxu0 0.0
      %382 = vmatpush1.msra.mxu0 0.0
      %383 = vmatprep.subr.mxu0 0.0
      %384 = vmatpush1.msra.mxu0 0.0
      %385 = vmatprep.subr.mxu0 0.0
      %386 = vmatpush1.msra.mxu0 0.0
      %387 = vmatprep.subr.mxu0 0.0
      %388 = vmatpush1.msra.mxu0 0.0
      %389 = vmatprep.subr.mxu0 0.0
      %390 = vmatpush1.msra.mxu0 0.0
      %391 = vmatprep.subr.mxu0 0.0
      %392 = vmatpush1.msra.mxu0 0.0
      %393 = vmatprep.subr.mxu0 0.0
      %394 = vmatpush1.msra.mxu0 0.0
      %395 = vmatprep.subr.mxu0 0.0
      %396 = vmatpush1.msra.mxu0 0.0
      %397 = vmatprep.subr.mxu0 0.0
      %398 = vmatpush1.msra.mxu0 0.0
      %399 = vmatprep.subr.mxu0 0.0
      %400 = vmatpush1.msra.mxu0 0.0
      %401 = vmatprep.subr.mxu0 0.0
      %402 = vmatpush1.msra.mxu0 0.0
      %403 = vmatprep.subr.mxu0 0.0
      %404 = vmatpush1.msra.mxu0 0.0
      %405 = vmatprep.subr.mxu0 0.0
      %406 = vmatpush1.msra.mxu0 0.0
      %407 = vmatprep.subr.mxu0 0.0
      %408 = vmatpush1.msra.mxu0 0.0
      %409 = vmatprep.subr.mxu0 0.0
      %410 = vmatpush1.msra.mxu0 0.0
      %411 = vmatprep.subr.mxu0 0.0
      %412 = vmatpush1.msra.mxu0 0.0
      %413 = vmatprep.subr.mxu0 0.0
      %414 = vmatpush1.msra.mxu0 0.0
      %415 = vmatprep.subr.mxu0 0.0
      %416 = vmatpush1.msra.mxu0 0.0
      %417 = vmatprep.subr.mxu0 0.0
      %418 = vmatpush1.msra.mxu0 0.0
      %419 = vmatprep.subr.mxu0 0.0
      %420 = vmatpush1.msra.mxu0 0.0
      %421 = vmatprep.mubr.f32.mxu0 0.0
      %422 = vmatmul.mubr.f32.gmra.mrb[0].mxu0 %v310
      %v423 = vpop.f32.mrb[0].mxu0
      %v424 = vadd.f32 %v306, %v423
      %v425 = vpop.f32.mrb[0].mxu0
      %426 = vmatprep.mubr.f32.mxu0 0.0
      %427 = vmatmul.mubr.f32.gmra.mrb[0].mxu0 %v313
      %v428 = vpop.f32.mrb[0].mxu0
      %v429 = vadd.f32 %v306, %v428
      %v430 = vpop.f32.mrb[0].mxu0
      %431 = vmatprep.mubr.f32.mxu0 0.0
      %432 = vmatmul.mubr.f32.gmra.mrb[0].mxu0 %v316
      %v433 = vpop.f32.mrb[0].mxu0
      %v434 = vadd.f32 %v306, %v433
      %v435 = vpop.f32.mrb[0].mxu0
      %436 = vmatprep.mubr.f32.mxu0 0.0
      %437 = vmatmul.mubr.f32.gmra.mrb[0].mxu0 %v319
      %v438 = vpop.f32.mrb[0].mxu0
      %v439 = vadd.f32 %v306, %v438
      %v440 = vpop.f32.mrb[0].mxu0
      %441 = vmatprep.mubr.f32.mxu0 0.0
      %442 = vmatmul.mubr.f32.gmra.mrb[0].mxu0 %v322
      %v443 = vpop.f32.mrb[0].mxu0
      %v444 = vadd.f32 %v306, %v443
      %v445 = vpop.f32.mrb[0].mxu0
      %446 = vmatprep.mubr.f32.mxu0 0.0
      %447 = vmatmul.mubr.f32.gmra.mrb[0].mxu0 %v325
      %v448 = vpop.f32.mrb[0].mxu0
      %v449 = vadd.f32 %v306, %v448
      %v450 = vpop.f32.mrb[0].mxu0
      %451 = vmatprep.mubr.f32.mxu0 0.0
      %452 = vmatmul.mubr.f32.gmra.mrb[0].mxu0 %v328
      %v453 = vpop.f32.mrb[0].mxu0
      %v454 = vadd.f32 %v306, %v453
      %v455 = vpop.f32.mrb[0].mxu0
      %456 = vmatprep.mubr.f32.mxu0 0.0
      %457 = vmatmul.mubr.f32.gmra.mrb[0].mxu0 %v331
      %v458 = vpop.f32.mrb[0].mxu0
      %v459 = vadd.f32 %v306, %v458
      %v460 = vpop.f32.mrb[0].mxu0
      %461 = vmatprep.mubr.f32.mxu0 0.0
      %462 = vmatmul.mubr.f32.gmra.mrb[0].mxu0 %v334
      %v463 = vpop.f32.mrb[0].mxu0
      %v464 = vadd.f32 %v306, %v463
      %v465 = vpop.f32.mrb[0].mxu0
      %466 = vmatprep.mubr.f32.mxu0 0.0
      %467 = vmatmul.mubr.f32.gmra.mrb[0].mxu0 %v337
      %v468 = vpop.f32.mrb[0].mxu0
      %v469 = vadd.f32 %v306, %v468
      %v470 = vpop.f32.mrb[0].mxu0
      %471 = vmatprep.mubr.f32.mxu0 0.0
      %472 = vmatmul.mubr.f32.gmra.mrb[0].mxu0 %v340
      %v473 = vpop.f32.mrb[0].mxu0
      %v474 = vadd.f32 %v306, %v473
      %v475 = vpop.f32.mrb[0].mxu0
      %476 = vmatprep.mubr.f32.mxu0 0.0
      %477 = vmatmul.mubr.f32.gmra.mrb[0].mxu0 %v343
      %v478 = vpop.f32.mrb[0].mxu0
      %v479 = vadd.f32 %v306, %v478
      %v480 = vpop.f32.mrb[0].mxu0
      %481 = vmatprep.mubr.f32.mxu0 0.0
      %482 = vmatmul.mubr.f32.gmra.mrb[0].mxu0 %v346
      %v483 = vpop.f32.mrb[0].mxu0
      %v484 = vadd.f32 %v306, %v483
      %v485 = vpop.f32.mrb[0].mxu0
      %486 = vmatprep.mubr.f32.mxu0 0.0
      %487 = vmatmul.mubr.f32.gmra.mrb[0].mxu0 %v349
      %v488 = vpop.f32.mrb[0].mxu0
      %v489 = vadd.f32 %v306, %v488
      %v490 = vpop.f32.mrb[0].mxu0
      %491 = vmatprep.mubr.f32.mxu0 0.0
      %492 = vmatmul.mubr.f32.gmra.mrb[0].mxu0 %v352
      %v493 = vpop.f32.mrb[0].mxu0
      %v494 = vadd.f32 %v306, %v493
      %v495 = vpop.f32.mrb[0].mxu0
      %496 = vmatprep.mubr.f32.mxu0 0.0
      %497 = vmatmul.mubr.f32.gmra.mrb[0].mxu0 %v355
      %v498 = vpop.f32.mrb[0].mxu0
      %v499 = vadd.f32 %v306, %v498
      %v500 = vpop.f32.mrb[0].mxu0
      %501 = vdwg.mxu0
      %v502 = vmax.f32 %v424, 0.0
      %v503 = vmax.f32 %v429, 0.0
      %v504 = vmax.f32 %v434, 0.0
      %v505 = vmax.f32 %v439, 0.0
      %v506 = vmax.f32 %v444, 0.0
      %v507 = vmax.f32 %v449, 0.0
      %v508 = vmax.f32 %v454, 0.0
      %v509 = vmax.f32 %v459, 0.0
      %v510 = vmax.f32 %v464, 0.0
      %v511 = vmax.f32 %v469, 0.0
      %v512 = vmax.f32 %v474, 0.0
      %v513 = vmax.f32 %v479, 0.0
      %v514 = vmax.f32 %v484, 0.0
      %v515 = vmax.f32 %v489, 0.0
      %v516 = vmax.f32 %v494, 0.0
      %v517 = vmax.f32 %v499, 0.0
      %v518 = vpack.c.bf16 %v503, %v502
      %v519 = vpack.c.bf16 %v505, %v504
      %v520 = vpack.c.bf16 %v507, %v506
      %v521 = vpack.c.bf16 %v509, %v508
      %v522 = vpack.c.bf16 %v511, %v510
      %v523 = vpack.c.bf16 %v513, %v512
      %v524 = vpack.c.bf16 %v515, %v514
      %v525 = vpack.c.bf16 %v517, %v516
      %v526 = vld [vmem:[%s3] sm:$0xf]
      %v527 = vld [vmem:[%s3 + $0x4] sm:$0xf]
      %v528 = vld [vmem:[%s3 + $0x8] sm:$0xf]
      %v529 = vld [vmem:[%s3 + $0xc] sm:$0xf]
      %v530 = vld [vmem:[%s3 + $0x10] sm:$0xf]
      %v531 = vld [vmem:[%s3 + $0x14] sm:$0xf]
      %v532 = vld [vmem:[%s3 + $0x18] sm:$0xf]
      %v533 = vld [vmem:[%s3 + $0x1c] sm:$0xf]
      %v534 = vld [vmem:[%s3 + $0x20] sm:$0xf]
      %v535 = vld [vmem:[%s3 + $0x24] sm:$0xf]
      %v536 = vld [vmem:[%s3 + $0x28] sm:$0xf]
      %v537 = vld [vmem:[%s3 + $0x2c] sm:$0xf]
      %v538 = vld [vmem:[%s3 + $0x30] sm:$0xf]
      %v539 = vld [vmem:[%s3 + $0x34] sm:$0xf]
      %v540 = vld [vmem:[%s3 + $0x38] sm:$0xf]
      %v541 = vld [vmem:[%s3 + $0x3c] sm:$0xf]
      %v542 = vld [vmem:[%s4] sm:$0x1]
      %v544 = vlaneseq
      %v545 = vshrl.u32 %v544, 7
      %v546 = vsub.s32 0, %v545
      %v547 = vrot.slane %v542, %v546
      %v565 = vunpack.c.l.b16 %v526
      %v566 = vunpack.c.l.b16 %v527
      %v567 = vunpack.c.l.b16 %v528
      %v568 = vunpack.c.l.b16 %v529
      %v569 = vunpack.c.l.b16 %v530
      %v570 = vunpack.c.l.b16 %v531
      %v571 = vunpack.c.l.b16 %v532
      %v572 = vunpack.c.l.b16 %v533
      %v573 = vunpack.c.l.b16 %v534
      %v574 = vunpack.c.l.b16 %v535
      %v575 = vunpack.c.l.b16 %v536
      %v576 = vunpack.c.l.b16 %v537
      %v577 = vunpack.c.l.b16 %v538
      %v578 = vunpack.c.l.b16 %v539
      %v579 = vunpack.c.l.b16 %v540
      %v580 = vunpack.c.l.b16 %v541
      %v581 = vpack.c.b16 %v566, %v565
      %v582 = vpack.c.b16 %v568, %v567
      %v583 = vpack.c.b16 %v570, %v569
      %v584 = vpack.c.b16 %v572, %v571
      %v585 = vpack.c.b16 %v574, %v573
      %v586 = vpack.c.b16 %v576, %v575
      %v587 = vpack.c.b16 %v578, %v577
      %v588 = vpack.c.b16 %v580, %v579
      %597 = vmatprep.subr.bf16.mxu0 0
      %598 = vmatpush1.bf16.msra.mxu0 %v581
      %599 = vmatprep.subr.bf16.mxu0 0
      %600 = vmatpush1.bf16.msra.mxu0 %v582
      %601 = vmatprep.subr.bf16.mxu0 0
      %602 = vmatpush1.bf16.msra.mxu0 %v583
      %603 = vmatprep.subr.bf16.mxu0 0
      %604 = vmatpush1.bf16.msra.mxu0 %v584
      %605 = vmatprep.subr.bf16.mxu0 0
      %606 = vmatpush1.bf16.msra.mxu0 %v585
      %607 = vmatprep.subr.bf16.mxu0 0
      %608 = vmatpush1.bf16.msra.mxu0 %v586
      %609 = vmatprep.subr.bf16.mxu0 0
      %610 = vmatpush1.bf16.msra.mxu0 %v587
      %611 = vmatprep.subr.bf16.mxu0 0
      %612 = vmatpush1.bf16.msra.mxu0 %v588
      %613 = vmatprep.subr.bf16.mxu0 0
      %614 = vmatpush1.bf16.msra.mxu0 0
      %615 = vmatprep.subr.bf16.mxu0 0
      %616 = vmatpush1.bf16.msra.mxu0 0
      %617 = vmatprep.subr.bf16.mxu0 0
      %618 = vmatpush1.bf16.msra.mxu0 0
      %619 = vmatprep.subr.bf16.mxu0 0
      %620 = vmatpush1.bf16.msra.mxu0 0
      %621 = vmatprep.subr.bf16.mxu0 0
      %622 = vmatpush1.bf16.msra.mxu0 0
      %623 = vmatprep.subr.bf16.mxu0 0
      %624 = vmatpush1.bf16.msra.mxu0 0
      %625 = vmatprep.subr.bf16.mxu0 0
      %626 = vmatpush1.bf16.msra.mxu0 0
      %627 = vmatprep.subr.bf16.mxu0 0
      %628 = vmatpush1.bf16.msra.mxu0 0
      %629 = vmatprep.mubr.bf16.mxu0 0
      %630 = vmatmul.mubr.bf16.gmra.mrb[0].mxu0 %v518
      %v631 = vpop.f32.mrb[0].mxu0
      %v632 = vadd.f32 %v547, %v631
      %v633 = vpop.f32.mrb[0].mxu0
      %v634 = vpop.f32.mrb[0].mxu0
      %v635 = vadd.f32 %v547, %v634
      %v636 = vpop.f32.mrb[0].mxu0
      %637 = vmatprep.mubr.bf16.mxu0 0
      %638 = vmatmul.mubr.bf16.gmra.mrb[0].mxu0 %v519
      %v639 = vpop.f32.mrb[0].mxu0
      %v640 = vadd.f32 %v547, %v639
      %v641 = vpop.f32.mrb[0].mxu0
      %v642 = vpop.f32.mrb[0].mxu0
      %v643 = vadd.f32 %v547, %v642
      %v644 = vpop.f32.mrb[0].mxu0
      %645 = vmatprep.mubr.bf16.mxu0 0
      %646 = vmatmul.mubr.bf16.gmra.mrb[0].mxu0 %v520
      %v647 = vpop.f32.mrb[0].mxu0
      %v648 = vadd.f32 %v547, %v647
      %v649 = vpop.f32.mrb[0].mxu0
      %v650 = vpop.f32.mrb[0].mxu0
      %v651 = vadd.f32 %v547, %v650
      %v652 = vpop.f32.mrb[0].mxu0
      %653 = vmatprep.mubr.bf16.mxu0 0
      %654 = vmatmul.mubr.bf16.gmra.mrb[0].mxu0 %v521
      %v655 = vpop.f32.mrb[0].mxu0
      %v656 = vadd.f32 %v547, %v655
      %v657 = vpop.f32.mrb[0].mxu0
      %v658 = vpop.f32.mrb[0].mxu0
      %v659 = vadd.f32 %v547, %v658
      %v660 = vpop.f32.mrb[0].mxu0
      %661 = vmatprep.mubr.bf16.mxu0 0
      %662 = vmatmul.mubr.bf16.gmra.mrb[0].mxu0 %v522
      %v663 = vpop.f32.mrb[0].mxu0
      %v664 = vadd.f32 %v547, %v663
      %v665 = vpop.f32.mrb[0].mxu0
      %v666 = vpop.f32.mrb[0].mxu0
      %v667 = vadd.f32 %v547, %v666
      %v668 = vpop.f32.mrb[0].mxu0
      %669 = vmatprep.mubr.bf16.mxu0 0
      %670 = vmatmul.mubr.bf16.gmra.mrb[0].mxu0 %v523
      %v671 = vpop.f32.mrb[0].mxu0
      %v672 = vadd.f32 %v547, %v671
      %v673 = vpop.f32.mrb[0].mxu0
      %v674 = vpop.f32.mrb[0].mxu0
      %v675 = vadd.f32 %v547, %v674
      %v676 = vpop.f32.mrb[0].mxu0
      %677 = vmatprep.mubr.bf16.mxu0 0
      %678 = vmatmul.mubr.bf16.gmra.mrb[0].mxu0 %v524
      %v679 = vpop.f32.mrb[0].mxu0
      %v680 = vadd.f32 %v547, %v679
      %v681 = vpop.f32.mrb[0].mxu0
      %v682 = vpop.f32.mrb[0].mxu0
      %v683 = vadd.f32 %v547, %v682
      %v684 = vpop.f32.mrb[0].mxu0
      %685 = vmatprep.mubr.bf16.mxu0 0
      %686 = vmatmul.mubr.bf16.gmra.mrb[0].mxu0 %v525
      %v687 = vpop.f32.mrb[0].mxu0
      %v688 = vadd.f32 %v547, %v687
      %v689 = vpop.f32.mrb[0].mxu0
      %v690 = vpop.f32.mrb[0].mxu0
      %v691 = vadd.f32 %v547, %v690
      %v692 = vpop.f32.mrb[0].mxu0
      %693 = vdwg.mxu0
      %v694 = vmax.f32 %v632, 0.0
      %v695 = vmax.f32 %v635, 0.0
      %v696 = vmax.f32 %v640, 0.0
      %v697 = vmax.f32 %v643, 0.0
      %v698 = vmax.f32 %v648, 0.0
      %v699 = vmax.f32 %v651, 0.0
      %v700 = vmax.f32 %v656, 0.0
      %v701 = vmax.f32 %v659, 0.0
      %v702 = vmax.f32 %v664, 0.0
      %v703 = vmax.f32 %v667, 0.0
      %v704 = vmax.f32 %v672, 0.0
      %v705 = vmax.f32 %v675, 0.0
      %v706 = vmax.f32 %v680, 0.0
      %v707 = vmax.f32 %v683, 0.0
      %v708 = vmax.f32 %v688, 0.0
      %v709 = vmax.f32 %v691, 0.0
      %v710 = vpack.c.bf16 %v695, %v694
      %v711 = vpack.c.bf16 %v697, %v696
      %v712 = vpack.c.bf16 %v699, %v698
      %v713 = vpack.c.bf16 %v701, %v700
      %v714 = vpack.c.bf16 %v703, %v702
      %v715 = vpack.c.bf16 %v705, %v704
      %v716 = vpack.c.bf16 %v707, %v706
      %v717 = vpack.c.bf16 %v709, %v708
      %v718 = vld [vmem:[%s5] sm:$0xf]
      %v719 = vld [vmem:[%s5 + $0x4] sm:$0xf]
      %v720 = vld [vmem:[%s5 + $0x8] sm:$0xf]
      %v721 = vld [vmem:[%s5 + $0xc] sm:$0xf]
      %v722 = vld [vmem:[%s5 + $0x10] sm:$0xf]
      %v723 = vld [vmem:[%s5 + $0x14] sm:$0xf]
      %v724 = vld [vmem:[%s5 + $0x18] sm:$0xf]
      %v725 = vld [vmem:[%s5 + $0x1c] sm:$0xf]
      %v726 = vld [vmem:[%s5 + $0x20] sm:$0xf]
      %v727 = vld [vmem:[%s5 + $0x24] sm:$0xf]
      %v728 = vld [vmem:[%s5 + $0x28] sm:$0xf]
      %v729 = vld [vmem:[%s5 + $0x2c] sm:$0xf]
      %v730 = vld [vmem:[%s5 + $0x30] sm:$0xf]
      %v731 = vld [vmem:[%s5 + $0x34] sm:$0xf]
      %v732 = vld [vmem:[%s5 + $0x38] sm:$0xf]
      %v733 = vld [vmem:[%s5 + $0x3c] sm:$0xf]
      %v734 = vld [vmem:[%s6] sm:$0x1]
      %v736 = vlaneseq
      %v737 = vshrl.u32 %v736, 7
      %v738 = vsub.s32 0, %v737
      %v739 = vrot.slane %v734, %v738
      %v757 = vunpack.c.l.b16 %v718
      %v758 = vunpack.c.l.b16 %v719
      %v759 = vunpack.c.l.b16 %v720
      %v760 = vunpack.c.l.b16 %v721
      %v761 = vunpack.c.l.b16 %v722
      %v762 = vunpack.c.l.b16 %v723
      %v763 = vunpack.c.l.b16 %v724
      %v764 = vunpack.c.l.b16 %v725
      %v765 = vunpack.c.l.b16 %v726
      %v766 = vunpack.c.l.b16 %v727
      %v767 = vunpack.c.l.b16 %v728
      %v768 = vunpack.c.l.b16 %v729
      %v769 = vunpack.c.l.b16 %v730
      %v770 = vunpack.c.l.b16 %v731
      %v771 = vunpack.c.l.b16 %v732
      %v772 = vunpack.c.l.b16 %v733
      %v773 = vpack.c.b16 %v758, %v757
      %v774 = vpack.c.b16 %v760, %v759
      %v775 = vpack.c.b16 %v762, %v761
      %v776 = vpack.c.b16 %v764, %v763
      %v777 = vpack.c.b16 %v766, %v765
      %v778 = vpack.c.b16 %v768, %v767
      %v779 = vpack.c.b16 %v770, %v769
      %v780 = vpack.c.b16 %v772, %v771
      %789 = vmatprep.subr.bf16.mxu0 0
      %790 = vmatpush1.bf16.msra.mxu0 %v773
      %791 = vmatprep.subr.bf16.mxu0 0
      %792 = vmatpush1.bf16.msra.mxu0 %v774
      %793 = vmatprep.subr.bf16.mxu0 0
      %794 = vmatpush1.bf16.msra.mxu0 %v775
      %795 = vmatprep.subr.bf16.mxu0 0
      %796 = vmatpush1.bf16.msra.mxu0 %v776
      %797 = vmatprep.subr.bf16.mxu0 0
      %798 = vmatpush1.bf16.msra.mxu0 %v777
      %799 = vmatprep.subr.bf16.mxu0 0
      %800 = vmatpush1.bf16.msra.mxu0 %v778
      %801 = vmatprep.subr.bf16.mxu0 0
      %802 = vmatpush1.bf16.msra.mxu0 %v779
      %803 = vmatprep.subr.bf16.mxu0 0
      %804 = vmatpush1.bf16.msra.mxu0 %v780
      %805 = vmatprep.subr.bf16.mxu0 0
      %806 = vmatpush1.bf16.msra.mxu0 0
      %807 = vmatprep.subr.bf16.mxu0 0
      %808 = vmatpush1.bf16.msra.mxu0 0
      %809 = vmatprep.subr.bf16.mxu0 0
      %810 = vmatpush1.bf16.msra.mxu0 0
      %811 = vmatprep.subr.bf16.mxu0 0
      %812 = vmatpush1.bf16.msra.mxu0 0
      %813 = vmatprep.subr.bf16.mxu0 0
      %814 = vmatpush1.bf16.msra.mxu0 0
      %815 = vmatprep.subr.bf16.mxu0 0
      %816 = vmatpush1.bf16.msra.mxu0 0
      %817 = vmatprep.subr.bf16.mxu0 0
      %818 = vmatpush1.bf16.msra.mxu0 0
      %819 = vmatprep.subr.bf16.mxu0 0
      %820 = vmatpush1.bf16.msra.mxu0 0
      %821 = vmatprep.mubr.bf16.mxu0 0
      %822 = vmatmul.mubr.bf16.gmra.mrb[0].mxu0 %v710
      %v823 = vpop.f32.mrb[0].mxu0
      %v824 = vadd.f32 %v739, %v823
      %v825 = vpop.f32.mrb[0].mxu0
      %v826 = vpop.f32.mrb[0].mxu0
      %v827 = vadd.f32 %v739, %v826
      %v828 = vpop.f32.mrb[0].mxu0
      %829 = vmatprep.mubr.bf16.mxu0 0
      %830 = vmatmul.mubr.bf16.gmra.mrb[0].mxu0 %v711
      %v831 = vpop.f32.mrb[0].mxu0
      %v832 = vadd.f32 %v739, %v831
      %v833 = vpop.f32.mrb[0].mxu0
      %v834 = vpop.f32.mrb[0].mxu0
      %v835 = vadd.f32 %v739, %v834
      %v836 = vpop.f32.mrb[0].mxu0
      %837 = vmatprep.mubr.bf16.mxu0 0
      %838 = vmatmul.mubr.bf16.gmra.mrb[0].mxu0 %v712
      %v839 = vpop.f32.mrb[0].mxu0
      %v840 = vadd.f32 %v739, %v839
      %v841 = vpop.f32.mrb[0].mxu0
      %v842 = vpop.f32.mrb[0].mxu0
      %v843 = vadd.f32 %v739, %v842
      %v844 = vpop.f32.mrb[0].mxu0
      %845 = vmatprep.mubr.bf16.mxu0 0
      %846 = vmatmul.mubr.bf16.gmra.mrb[0].mxu0 %v713
      %v847 = vpop.f32.mrb[0].mxu0
      %v848 = vadd.f32 %v739, %v847
      %v849 = vpop.f32.mrb[0].mxu0
      %v850 = vpop.f32.mrb[0].mxu0
      %v851 = vadd.f32 %v739, %v850
      %v852 = vpop.f32.mrb[0].mxu0
      %853 = vmatprep.mubr.bf16.mxu0 0
      %854 = vmatmul.mubr.bf16.gmra.mrb[0].mxu0 %v714
      %v855 = vpop.f32.mrb[0].mxu0
      %v856 = vadd.f32 %v739, %v855
      %v857 = vpop.f32.mrb[0].mxu0
      %v858 = vpop.f32.mrb[0].mxu0
      %v859 = vadd.f32 %v739, %v858
      %v860 = vpop.f32.mrb[0].mxu0
      %861 = vmatprep.mubr.bf16.mxu0 0
      %862 = vmatmul.mubr.bf16.gmra.mrb[0].mxu0 %v715
      %v863 = vpop.f32.mrb[0].mxu0
      %v864 = vadd.f32 %v739, %v863
      %v865 = vpop.f32.mrb[0].mxu0
      %v866 = vpop.f32.mrb[0].mxu0
      %v867 = vadd.f32 %v739, %v866
      %v868 = vpop.f32.mrb[0].mxu0
      %869 = vmatprep.mubr.bf16.mxu0 0
      %870 = vmatmul.mubr.bf16.gmra.mrb[0].mxu0 %v716
      %v871 = vpop.f32.mrb[0].mxu0
      %v872 = vadd.f32 %v739, %v871
      %v873 = vpop.f32.mrb[0].mxu0
      %v874 = vpop.f32.mrb[0].mxu0
      %v875 = vadd.f32 %v739, %v874
      %v876 = vpop.f32.mrb[0].mxu0
      %877 = vmatprep.mubr.bf16.mxu0 0
      %878 = vmatmul.mubr.bf16.gmra.mrb[0].mxu0 %v717
      %v879 = vpop.f32.mrb[0].mxu0
      %v880 = vadd.f32 %v739, %v879
      %v881 = vpop.f32.mrb[0].mxu0
      %v882 = vpop.f32.mrb[0].mxu0
      %v883 = vadd.f32 %v739, %v882
      %v884 = vpop.f32.mrb[0].mxu0
      %885 = vdwg.mxu0
      %v886 = vxor.u32 %v824, 2147483648
      %v887 = vxor.u32 %v827, 2147483648
      %v888 = vxor.u32 %v832, 2147483648
      %v889 = vxor.u32 %v835, 2147483648
      %v890 = vxor.u32 %v840, 2147483648
      %v891 = vxor.u32 %v843, 2147483648
      %v892 = vxor.u32 %v848, 2147483648
      %v893 = vxor.u32 %v851, 2147483648
      %v894 = vxor.u32 %v856, 2147483648
      %v895 = vxor.u32 %v859, 2147483648
      %v896 = vxor.u32 %v864, 2147483648
      %v897 = vxor.u32 %v867, 2147483648
      %v898 = vxor.u32 %v872, 2147483648
      %v899 = vxor.u32 %v875, 2147483648
      %v900 = vxor.u32 %v880, 2147483648
      %v901 = vxor.u32 %v883, 2147483648
      %v902 = vmul.f32 %v886, 1.442695
      %v903 = vpow.pop %v902
      %v904 = vmul.f32 %v887, 1.442695
      %v905 = vpow.pop %v904
      %v906 = vmul.f32 %v888, 1.442695
      %v907 = vpow.pop %v906
      %v908 = vmul.f32 %v889, 1.442695
      %v909 = vpow.pop %v908
      %v910 = vmul.f32 %v890, 1.442695
      %v911 = vpow.pop %v910
      %v912 = vmul.f32 %v891, 1.442695
      %v913 = vpow.pop %v912
      %v914 = vmul.f32 %v892, 1.442695
      %v915 = vpow.pop %v914
      %v916 = vmul.f32 %v893, 1.442695
      %v917 = vpow.pop %v916
      %v918 = vmul.f32 %v894, 1.442695
      %v919 = vpow.pop %v918
      %v920 = vmul.f32 %v895, 1.442695
      %v921 = vpow.pop %v920
      %v922 = vmul.f32 %v896, 1.442695
      %v923 = vpow.pop %v922
      %v924 = vmul.f32 %v897, 1.442695
      %v925 = vpow.pop %v924
      %v926 = vmul.f32 %v898, 1.442695
      %v927 = vpow.pop %v926
      %v928 = vmul.f32 %v899, 1.442695
      %v929 = vpow.pop %v928
      %v930 = vmul.f32 %v900, 1.442695
      %v931 = vpow.pop %v930
      %v932 = vmul.f32 %v901, 1.442695
      %v933 = vpow.pop %v932
      %v934 = vadd.f32 %v903, 1.0
      %v935 = vadd.f32 %v905, 1.0
      %v936 = vadd.f32 %v907, 1.0
      %v937 = vadd.f32 %v909, 1.0
      %v938 = vadd.f32 %v911, 1.0
      %v939 = vadd.f32 %v913, 1.0
      %v940 = vadd.f32 %v915, 1.0
      %v941 = vadd.f32 %v917, 1.0
      %v942 = vadd.f32 %v919, 1.0
      %v943 = vadd.f32 %v921, 1.0
      %v944 = vadd.f32 %v923, 1.0
      %v945 = vadd.f32 %v925, 1.0
      %v946 = vadd.f32 %v927, 1.0
      %v947 = vadd.f32 %v929, 1.0
      %v948 = vadd.f32 %v931, 1.0
      %v949 = vadd.f32 %v933, 1.0
      %v950 = vrcp.pop %v934
      %v951 = vmul.f32 1.0, %v950
      %v952 = vrcp.pop %v935
      %v953 = vmul.f32 1.0, %v952
      %v954 = vrcp.pop %v936
      %v955 = vmul.f32 1.0, %v954
      %v956 = vrcp.pop %v937
      %v957 = vmul.f32 1.0, %v956
      %v958 = vrcp.pop %v938
      %v959 = vmul.f32 1.0, %v958
      %v960 = vrcp.pop %v939
      %v961 = vmul.f32 1.0, %v960
      %v962 = vrcp.pop %v940
      %v963 = vmul.f32 1.0, %v962
      %v964 = vrcp.pop %v941
      %v965 = vmul.f32 1.0, %v964
      %v966 = vrcp.pop %v942
      %v967 = vmul.f32 1.0, %v966
      %v968 = vrcp.pop %v943
      %v969 = vmul.f32 1.0, %v968
      %v970 = vrcp.pop %v944
      %v971 = vmul.f32 1.0, %v970
      %v972 = vrcp.pop %v945
      %v973 = vmul.f32 1.0, %v972
      %v974 = vrcp.pop %v946
      %v975 = vmul.f32 1.0, %v974
      %v976 = vrcp.pop %v947
      %v977 = vmul.f32 1.0, %v976
      %v978 = vrcp.pop %v948
      %v979 = vmul.f32 1.0, %v978
      %v980 = vrcp.pop %v949
      %v981 = vmul.f32 1.0, %v980
      %v982 = vpack.c.bf16 %v953, %v951
      %v983 = vpack.c.bf16 %v957, %v955
      %v984 = vpack.c.bf16 %v961, %v959
      %v985 = vpack.c.bf16 %v965, %v963
      %v986 = vpack.c.bf16 %v969, %v967
      %v987 = vpack.c.bf16 %v973, %v971
      %v988 = vpack.c.bf16 %v977, %v975
      %v989 = vpack.c.bf16 %v981, %v979
      %v998 = vunpack.c.l.b16 %v982
      %v999 = vunpack.c.h.b16 %v982
      %v1000 = vunpack.c.l.b16 %v983
      %v1001 = vunpack.c.h.b16 %v983
      %v1002 = vunpack.c.l.b16 %v984
      %v1003 = vunpack.c.h.b16 %v984
      %v1004 = vunpack.c.l.b16 %v985
      %v1005 = vunpack.c.h.b16 %v985
      %v1006 = vunpack.c.l.b16 %v986
      %v1007 = vunpack.c.h.b16 %v986
      %v1008 = vunpack.c.l.b16 %v987
      %v1009 = vunpack.c.h.b16 %v987
      %v1010 = vunpack.c.l.b16 %v988
      %v1011 = vunpack.c.h.b16 %v988
      %v1012 = vunpack.c.l.b16 %v989
      %v1013 = vunpack.c.h.b16 %v989
      %v1014 = vpack.c.b16 %v998, %v998
      %v1015 = vpack.c.b16 %v999, %v999
      %v1016 = vpack.c.b16 %v1000, %v1000
      %v1017 = vpack.c.b16 %v1001, %v1001
      %v1018 = vpack.c.b16 %v1002, %v1002
      %v1019 = vpack.c.b16 %v1003, %v1003
      %v1020 = vpack.c.b16 %v1004, %v1004
      %v1021 = vpack.c.b16 %v1005, %v1005
      %v1022 = vpack.c.b16 %v1006, %v1006
      %v1023 = vpack.c.b16 %v1007, %v1007
      %v1024 = vpack.c.b16 %v1008, %v1008
      %v1025 = vpack.c.b16 %v1009, %v1009
      %v1026 = vpack.c.b16 %v1010, %v1010
      %v1027 = vpack.c.b16 %v1011, %v1011
      %v1028 = vpack.c.b16 %v1012, %v1012
      %v1029 = vpack.c.b16 %v1013, %v1013
      %1046 = vst [vmem:[%s280] sm:$0xf] %v1014
      %1047 = vst [vmem:[%s280 + $0x4] sm:$0xf] %v1015
      %1048 = vst [vmem:[%s280 + $0x8] sm:$0xf] %v1016
      %1049 = vst [vmem:[%s280 + $0xc] sm:$0xf] %v1017
      %1050 = vst [vmem:[%s280 + $0x10] sm:$0xf] %v1018
      %1051 = vst [vmem:[%s280 + $0x14] sm:$0xf] %v1019
      %1052 = vst [vmem:[%s280 + $0x18] sm:$0xf] %v1020
      %1053 = vst [vmem:[%s280 + $0x1c] sm:$0xf] %v1021
      %1054 = vst [vmem:[%s280 + $0x20] sm:$0xf] %v1022
      %1055 = vst [vmem:[%s280 + $0x24] sm:$0xf] %v1023
      %1056 = vst [vmem:[%s280 + $0x28] sm:$0xf] %v1024
      %1057 = vst [vmem:[%s280 + $0x2c] sm:$0xf] %v1025
      %1058 = vst [vmem:[%s280 + $0x30] sm:$0xf] %v1026
      %1059 = vst [vmem:[%s280 + $0x34] sm:$0xf] %v1027
      %1060 = vst [vmem:[%s280 + $0x38] sm:$0xf] %v1028
      %1061 = vst [vmem:[%s280 + $0x3c] sm:$0xf] %v1029
      %s1062 = smul.u32 16, %s18
      %p1063 = scmp.lt.s32.totalorder %s1062, 63
      %s1064 = scalar_select %p1063, %s1062, 63
      %s1065 = smul.addr %s1064, 4
      %s1066 = scalar_lea.vmem %s7, %s1065
      // Predicated region
      $region49: #{discriminator_forward.1} parent=47 // pred_check
        %p1067 = pneg %p188
      $region50: #{discriminator_forward.1} parent=47 // pred_check_branch
        %1069 = sbr.rel (%p1067) target = $region52
      $region51: #{discriminator_forward.1} parent=47 // pred_region
        %s1070 = smul.u32 16, %s18
      $region52: #{discriminator_forward.1} parent=47 // pred_fallthru
        _
    $region48: #{discriminator_forward.1} parent=5 // pred_fallthru
      _
    %p1071 = scmp.le.s32.totalorder 2, %s13
    // Predicated region
    $region53: #{discriminator_forward.1} parent=5 // pred_check
      %p1072 = pneg %p1071
    $region54: #{discriminator_forward.1} parent=5 // pred_check_branch
      %1074 = sbr.rel (%p1072) target = $region56
    $region55: #{discriminator_forward.1} parent=5 // pred_region
      %s1075 = ssub.s32 %s13, 2
      // Predicated region
      $region57: #{discriminator_forward.1} parent=55 // pred_check
        %p1076 = pneg %p194
      $region58: #{discriminator_forward.1} parent=55 // pred_check_branch
        %1078 = sbr.rel (%p1076) target = $region60
      $region59: #{discriminator_forward.1} parent=55 // pred_region
        %s1079 = smul.u32 16, %s19
        %p1080 = scmp.lt.s32.totalorder %s1079, 63
        %s1081 = scalar_select %p1080, %s1079, 63
        %s1082 = smul.addr %s1081, 4
        %s1083 = scalar_lea.vmem %s7, %s1082
      $region60: #{discriminator_forward.1} parent=55 // pred_fallthru
        _
    $region56: #{discriminator_forward.1} parent=5 // pred_fallthru
      _
  $region6: #{discriminator_forward.1} parent=0 // loop_footer
    %s17 = sadd.s32 1, %s13
  $region7: #{discriminator_forward.1} parent=0 // loop_footer_branch
    %12 = sbr.rel target = $region3
  $region8: #{discriminator_forward.1} parent=0 // loop_exit
    _

</llo_original>
